<compile_context>
chip_gen: v6e
topology: v6e:2x2x1
jax: 0.10.0
libtpu: 0.0.40
codegen_flags: <defaults>
</compile_context>

<pallas_src>
import functools

import jax
import jax.numpy as jnp
from jax import lax
from jax.experimental import pallas as pl
from jax.experimental.pallas import tpu as pltpu


def _round_up(x, m):
    return (x + m - 1) // m * m


def _pick_tile(n, candidates):
    for c in candidates:
        if n % c == 0:
            return c
    return n


# ---------------------------------------------------------------------------
# Stage 1: l2_weights = softmax(map_weights, dim=1) @ l1_weights  (one shot)
# Emits the bf16 table and its transpose; row-tiled so it scales with V2.
# ---------------------------------------------------------------------------
def _l2_weights_kernel(map_ref, l1_ref, l2w_ref, l2wt_ref, *,
                       v1_real, v2_real, row_tile):
    i = pl.program_id(0)
    m = map_ref[...]                                    # (row_tile, V1p) f32
    col = lax.broadcasted_iota(jnp.int32, m.shape, 1)
    m = jnp.where(col < v1_real, m, -jnp.inf)           # exclude padded V1 cols
    m = m - jnp.max(m, axis=1, keepdims=True)           # softmax(dim=1) in f32
    e = jnp.exp(m)
    sm = e * pl.reciprocal(jnp.sum(e, axis=1, keepdims=True))
    # Zero padded V2 rows so padded logits columns downstream are exactly zero.
    row = lax.broadcasted_iota(jnp.int32, sm.shape, 0) + i * row_tile
    sm = jnp.where(row < v2_real, sm, 0.0)
    # bf16 operands on the MXU, f32 accumulation.
    l2w = jnp.dot(sm.astype(jnp.bfloat16), l1_ref[...].astype(jnp.bfloat16),
                  preferred_element_type=jnp.float32)   # (row_tile, Ep) f32
    l2w_ref[...] = l2w.astype(l2w_ref.dtype)
    l2wt_ref[...] = l2w.T.astype(l2wt_ref.dtype)        # one-shot transpose


def _compute_l2_weights(map_w_pad, l1_pad, v1_real, v2_real):
    v2p, v1p = map_w_pad.shape
    _, ep = l1_pad.shape
    row_tile = _pick_tile(v2p, (512, 256, 128))
    return pl.pallas_call(
        functools.partial(_l2_weights_kernel, v1_real=v1_real,
                          v2_real=v2_real, row_tile=row_tile),
        grid=(v2p // row_tile,),
        out_shape=(
            jax.ShapeDtypeStruct((v2p, ep), jnp.bfloat16),   # l2w
            jax.ShapeDtypeStruct((ep, v2p), jnp.bfloat16),   # l2w^T
        ),
        in_specs=[
            pl.BlockSpec((row_tile, v1p), lambda i: (i, 0)),
            pl.BlockSpec((v1p, ep), lambda i: (0, 0)),
        ],
        out_specs=(
            pl.BlockSpec((row_tile, ep), lambda i: (i, 0)),
            pl.BlockSpec((ep, row_tile), lambda i: (0, i)),
        ),
        compiler_params=pltpu.CompilerParams(
            dimension_semantics=("parallel",)),
    )(map_w_pad, l1_pad)


# ---------------------------------------------------------------------------
# Stage 2: per-token-tile embedding lookup (MapEmbedding) + logits (MapLinear)
# Grid: (token tiles [parallel], V2 tiles [arbitrary]).
# ---------------------------------------------------------------------------
def _map_fwd_kernel(ids_ref, h_ref, l2w_ref, l2wt_ref, emb_ref, logits_ref):
    # MapLinear.forward: hidden @ l2_weights.T via the pre-transposed table
    # (plain MXU matmul, no per-tile transpose). Cast to bf16 in-register if
    # the wrapper handed us unpadded f32 hidden.
    h = h_ref[...].astype(jnp.bfloat16)                 # (T, Ep)
    logits_ref[...] = jnp.dot(h, l2wt_ref[...],
                              preferred_element_type=jnp.float32)

    # MapEmbedding.forward: one-hot MXU gather from the resident bf16 table.
    # Independent of the V2 tile axis -> computed once per token tile.
    @pl.when(pl.program_id(1) == pl.num_programs(1) - 1)
    def _():
        l2w = l2w_ref[...]                              # (V2p, Ep) bf16
        ids = ids_ref[...]                              # (T, 1) int32
        onehot = (lax.broadcasted_iota(
            jnp.int32, (ids.shape[0], l2w.shape[0]), 1) == ids
        ).astype(l2w.dtype)
        emb_ref[...] = jnp.dot(
            onehot, l2w, preferred_element_type=jnp.float32
        ).astype(emb_ref.dtype)                         # bf16 writeback


def cencoder_model_map_forward(map_weights, l1_weights, token_ids, hidden,
                               *, token_tile=1024, v2_tile_max=2048):
    """MapEmbedding + MapLinear forward path.

    map_weights: (V2, V1) f32   l1_weights: (V1, E) f32
    token_ids:   (B, S)  int    hidden:     (B, S, E) f32
    returns: (l2_emb (B, S, E) bf16, logits (B, S, V2) f32)
    Note: l2_emb is bf16 because the l2 table is stored bf16 (an f32 store
    would carry no extra information).
    """
    V2, V1 = map_weights.shape
    V1b, E = l1_weights.shape
    assert V1b == V1
    B, S = token_ids.shape
    BS = B * S

    LANE = 128
    V1p, V2p, Ep = _round_up(V1, LANE), _round_up(V2, LANE), _round_up(E, LANE)

    # ---- stage 1: l2 weight tables (f32 softmax, bf16 matmul + storage) ----
    map_pad = map_weights.astype(jnp.float32)
    if (V2p, V1p) != (V2, V1):
        map_pad = jnp.pad(map_pad, ((0, V2p - V2), (0, V1p - V1)))
    l1_pad = l1_weights.astype(jnp.float32)
    if (V1p, Ep) != (V1, E):
        l1_pad = jnp.pad(l1_pad, ((0, V1p - V1), (0, Ep - E)))
    l2w, l2w_t = _compute_l2_weights(map_pad, l1_pad, V1, V2)

    # ---- stage 2 tiling ------------------------------------------------------
    BSp = _round_up(BS, 8)
    if BSp <= token_tile:
        token_tile = BSp
    else:
        BSp = _round_up(BS, token_tile)
    n_tok = BSp // token_tile
    v2_tile = _pick_tile(V2p, (v2_tile_max, 1024, 512, 256, 128))
    n_v2 = V2p // v2_tile

    ids2d = token_ids.reshape(BS, 1).astype(jnp.int32)
    if BSp != BS:
        ids2d = jnp.pad(ids2d, ((0, BSp - BS), (0, 0)))

    h2d = hidden.reshape(BS, E)
    if (BSp != BS) or (Ep != E):
        # Padding genuinely needed: fuse pad + bf16 cast into one wrapper pass.
        h2d = jnp.pad(h2d, ((0, BSp - BS), (0, Ep - E))).astype(jnp.bfloat16)
    # else: hand the f32 array straight to the kernel; it casts in-register.

    emb_p, logits_p = pl.pallas_call(
        _map_fwd_kernel,
        grid=(n_tok, n_v2),
        out_shape=(
            jax.ShapeDtypeStruct((BSp, Ep), jnp.bfloat16),   # l2_emb
            jax.ShapeDtypeStruct((BSp, V2p), jnp.float32),   # logits
        ),
        in_specs=[
            pl.BlockSpec((token_tile, 1), lambda i, j: (i, 0)),    # token ids
            pl.BlockSpec((token_tile, Ep), lambda i, j: (i, 0)),   # hidden
            pl.BlockSpec((V2p, Ep), lambda i, j: (0, 0)),          # l2w (resident)
            pl.BlockSpec((Ep, v2_tile), lambda i, j: (0, j)),      # l2w^T tile
        ],
        out_specs=(
            pl.BlockSpec((token_tile, Ep), lambda i, j: (i, 0)),
            pl.BlockSpec((token_tile, v2_tile), lambda i, j: (i, j)),
        ),
        compiler_params=pltpu.CompilerParams(
            dimension_semantics=("parallel", "arbitrary"),
            vmem_limit_bytes=64 * 1024 * 1024),
    )(ids2d, h2d, l2w, l2w_t)

    # No-op views when nothing was padded.
    emb = emb_p[:BS, :E].reshape(B, S, E)
    logits = logits_p[:BS, :V2].reshape(B, S, V2)
    return emb, logits


# ---------------------------------------------------------------------------
# References for self-check
# ---------------------------------------------------------------------------
def _reference_bf16(map_weights, l1_weights, token_ids, hidden):
    # Mirrors the kernel's numerics: f32 softmax (e * 1/sum), bf16 operands on
    # the matmuls with f32 accumulation, bf16 table.
    mw = map_weights.astype(jnp.float32)
    m = mw - jnp.max(mw, axis=1, keepdims=True)
    e = jnp.exp(m)
    sm = e * (1.0 / jnp.sum(e, axis=1, keepdims=True))
    l2_bf = jnp.dot(sm.astype(jnp.bfloat16), l1_weights.astype(jnp.bfloat16),
                    preferred_element_type=jnp.float32).astype(jnp.bfloat16)
    B, S = token_ids.shape
    E = l1_weights.shape[1]
    emb = l2_bf[token_ids.reshape(-1)].reshape(B, S, E)
    h_bf = hidden.reshape(B * S, E).astype(jnp.bfloat16)
    logits = lax.dot_general(h_bf, l2_bf, (((1,), (1,)), ((), ())),
                             preferred_element_type=jnp.float32)
    return emb, logits.reshape(B, S, -1)


def _reference_f32(map_weights, l1_weights, token_ids, hidden):
    sm = jax.nn.softmax(map_weights.astype(jnp.float32), axis=1)
    l2_w = sm @ l1_weights.astype(jnp.float32)
    B, S = token_ids.shape
    emb = l2_w[token_ids.reshape(-1)].reshape(B, S, l2_w.shape[1])
    logits = hidden.astype(jnp.float32).reshape(B * S, -1) @ l2_w.T
    return emb, logits.reshape(B, S, -1)


if __name__ == "__main__":
    # Small synthetic shapes consistent with the module:
    #   L1 vocab V1=32, L2 vocab V2=16, embedding dim E=32, batch B=2, seq S=8
    V1, V2, E = 32, 16, 32
    B, S = 2, 8

    key = jax.random.PRNGKey(0)
    k_l1, k_map, k_ids, k_h = jax.random.split(key, 4)

    l1_weights = jax.random.normal(k_l1, (V1, E), dtype=jnp.float32)   # encoder.weight
    map_weights = jax.random.normal(k_map, (V2, V1), dtype=jnp.float32)
    token_ids = jax.random.randint(k_ids, (B, S), 0, V2, dtype=jnp.int32)
    hidden = jax.random.normal(k_h, (B, S, E), dtype=jnp.float32)

    emb, logits = cencoder_model_map_forward(map_weights, l1_weights,
                                             token_ids, hidden)
    jax.block_until_ready((emb, logits))

    emb_bf, logits_bf = _reference_bf16(map_weights, l1_weights, token_ids, hidden)
    emb_f32, logits_f32 = _reference_f32(map_weights, l1_weights, token_ids, hidden)

    assert emb.shape == (B, S, E) and emb.dtype == jnp.bfloat16
    assert logits.shape == (B, S, V2) and logits.dtype == jnp.float32

    # Tight check against a reference with the kernel's bf16/MXU numerics.
    assert jnp.allclose(emb.astype(jnp.float32), emb_bf.astype(jnp.float32),
                        atol=2e-2, rtol=2e-2)
    assert jnp.allclose(logits, logits_bf, atol=5e-2, rtol=5e-2)
    # Semantic check against the pure-f32 PyTorch-equivalent path
    # (tolerance loosened for bf16 operand/table rounding).
    assert jnp.allclose(emb.astype(jnp.float32), emb_f32, atol=6e-2, rtol=6e-2)
    assert jnp.allclose(logits, logits_f32, atol=3e-1, rtol=1e-1)

    print("KERNEL_OK")
</pallas_src>

<mosaic_0001>
module attributes {stable_mosaic.version = 11 : i64} {
  func.func @_l2_weights_kernel(%arg0: i32, %arg1: memref<128x128xf32, #tpu.memory_space<vmem>>, %arg2: memref<128x128xf32, #tpu.memory_space<vmem>>, %arg3: memref<128x128xbf16, #tpu.memory_space<vmem>>, %arg4: memref<128x128xbf16, #tpu.memory_space<vmem>>) attributes {dimension_semantics = [#tpu.dimension_semantics<parallel>], iteration_bounds = array<i64: 1>, scalar_prefetch = 0 : i64, scratch_operands = 0 : i64, tpu.core_type = #tpu.core_type<tc>, window_params = [{transform_indices = @transform_0, window_bounds = array<i64: 128, 128>}, {pipeline_mode = #tpu.pipeline_mode<synchronous>, transform_indices = @transform_1, window_bounds = array<i64: 128, 128>}, {transform_indices = @transform_2, window_bounds = array<i64: 128, 128>}, {transform_indices = @transform_3, window_bounds = array<i64: 128, 128>}]} {
    %c0 = arith.constant 0 : index
    %c0_0 = arith.constant 0 : index
    %0 = vector.load %arg1[%c0, %c0_0] : memref<128x128xf32, #tpu.memory_space<vmem>>, vector<128x128xf32>
    %1 = tpu.iota {dimensions = array<i32: 1>} : vector<128x128xi32>
    %c32_i32 = arith.constant 32 : i32
    %2 = vector.broadcast %c32_i32 : i32 to vector<128x128xi32>
    %3 = arith.cmpi slt, %1, %2 : vector<128x128xi32>
    %cst = arith.constant 0xFF800000 : f32
    %4 = vector.broadcast %cst : f32 to vector<128x128xf32>
    %5 = arith.select %3, %0, %4 : vector<128x128xi1>, vector<128x128xf32>
    %cst_1 = arith.constant dense<0xFF800000> : vector<128xf32>
    %6 = vector.multi_reduction <maximumf>, %5, %cst_1 [1] : vector<128x128xf32> to vector<128xf32>
    %7 = vector.shape_cast %6 : vector<128xf32> to vector<128x1xf32>
    %8 = vector.broadcast %7 : vector<128x1xf32> to vector<128x128xf32>
    %9 = arith.subf %5, %8 : vector<128x128xf32>
    %10 = math.exp %9 : vector<128x128xf32>
    %cst_2 = arith.constant dense<0.000000e+00> : vector<128xf32>
    %11 = vector.multi_reduction <add>, %10, %cst_2 [1] : vector<128x128xf32> to vector<128xf32>
    %12 = vector.shape_cast %11 : vector<128xf32> to vector<128x1xf32>
    %13 = tpu.reciprocal %12 : vector<128x1xf32> -> vector<128x1xf32>
    %14 = vector.broadcast %13 : vector<128x1xf32> to vector<128x128xf32>
    %15 = arith.mulf %10, %14 : vector<128x128xf32>
    %16 = tpu.iota {dimensions = array<i32: 0>} : vector<128x128xi32>
    %c128_i32 = arith.constant 128 : i32
    %17 = arith.muli %arg0, %c128_i32 : i32
    %18 = vector.broadcast %17 : i32 to vector<128x128xi32>
    %19 = arith.addi %16, %18 : vector<128x128xi32>
    %c16_i32 = arith.constant 16 : i32
    %20 = vector.broadcast %c16_i32 : i32 to vector<128x128xi32>
    %21 = arith.cmpi slt, %19, %20 : vector<128x128xi32>
    %cst_3 = arith.constant 0.000000e+00 : f32
    %22 = vector.broadcast %cst_3 : f32 to vector<128x128xf32>
    %23 = arith.select %21, %15, %22 : vector<128x128xi1>, vector<128x128xf32>
    %24 = arith.truncf %23 : vector<128x128xf32> to vector<128x128xbf16>
    %c0_4 = arith.constant 0 : index
    %c0_5 = arith.constant 0 : index
    %25 = vector.load %arg2[%c0_4, %c0_5] : memref<128x128xf32, #tpu.memory_space<vmem>>, vector<128x128xf32>
    %26 = arith.truncf %25 : vector<128x128xf32> to vector<128x128xbf16>
    %cst_6 = arith.constant dense<0.000000e+00> : vector<128x128xf32>
    %27 = tpu.matmul %24, %26, %cst_6 {dimension_numbers = #tpu.dot_dimension_numbers<[1], [0], [0], [1], [0, 0, 1, 1], [], []>} : vector<128x128xbf16>, vector<128x128xbf16>, vector<128x128xf32> -> vector<128x128xf32>
    %28 = arith.truncf %27 : vector<128x128xf32> to vector<128x128xbf16>
    %c0_7 = arith.constant 0 : index
    %c0_8 = arith.constant 0 : index
    %29 = vector.load %arg3[%c0_7, %c0_8] : memref<128x128xbf16, #tpu.memory_space<vmem>>, vector<128x128xbf16>
    tpu.vector_store %arg3[%c0_7, %c0_8], %28 {strides = array<i32>} : memref<128x128xbf16, #tpu.memory_space<vmem>>, vector<128x128xbf16>,
    %30 = tpu.transpose %27, [1, 0] : vector<128x128xf32> -> vector<128x128xf32>
    %31 = arith.truncf %30 : vector<128x128xf32> to vector<128x128xbf16>
    %c0_9 = arith.constant 0 : index
    %c0_10 = arith.constant 0 : index
    %32 = vector.load %arg4[%c0_9, %c0_10] : memref<128x128xbf16, #tpu.memory_space<vmem>>, vector<128x128xbf16>
    tpu.vector_store %arg4[%c0_9, %c0_10], %31 {strides = array<i32>} : memref<128x128xbf16, #tpu.memory_space<vmem>>, vector<128x128xbf16>,
    return
  }
  func.func @transform_0(%arg0: i32) -> (i32, i32) {
    %c0_i32 = arith.constant 0 : i32
    %c0_i32_0 = arith.constant 0 : i32
    return %arg0, %c0_i32 : i32, i32
  }
  func.func @transform_1(%arg0: i32) -> (i32, i32) {
    %c0_i32 = arith.constant 0 : i32
    %c0_i32_0 = arith.constant 0 : i32
    %c0_i32_1 = arith.constant 0 : i32
    return %c0_i32, %c0_i32_0 : i32, i32
  }
  func.func @transform_2(%arg0: i32) -> (i32, i32) {
    %c0_i32 = arith.constant 0 : i32
    %c0_i32_0 = arith.constant 0 : i32
    return %arg0, %c0_i32 : i32, i32
  }
  func.func @transform_3(%arg0: i32) -> (i32, i32) {
    %c0_i32 = arith.constant 0 : i32
    %c0_i32_0 = arith.constant 0 : i32
    return %c0_i32, %arg0 : i32, i32
  }
}

</mosaic_0001>

<llo_original>
// kernel: tpu_custom_call.1
$region0: #{tpu_custom_call.1}
  #allocation0 [shape = 'u32[]', space=smem, size = 0x4, offset = 0x4, fixed_abs, tag = 'smem constant byte address 0x4 - core index']
  #allocation1 [shape = 'u32[144,128]{1,0:T(1,128)}', space=vmem, size = 0x12000, scoped, tag = 'internal scratch']
  %s0 = inlined_call_operand.hbm [shape: f32[128,128], index: 0, kind: input, shape index: {}]
  %s1 = inlined_call_operand.hbm [shape: f32[128,128], index: 1, kind: input, shape index: {}]
  %s2 = inlined_call_operand.hbm [shape: bf16[128,128], index: 2, kind: output, shape index: {0}]
  %s3 = inlined_call_operand.hbm [shape: bf16[128,128], index: 3, kind: output, shape index: {1}]
  %4 = xla_tuple %s2, %s3
  %s5 = sld [smem:[#allocation0]]
  $region34: #{tpu_custom_call.1} parent=0
    _
  %s7 = ssub.s32 1, %s5
  %s8 = scalar_select 0, %s7, %s5
  $region1: #{tpu_custom_call.1} parent=0
    #allocation2 [shape = 'u8[65536]{0}', space=vmem, size = 0x10000, scoped, tag = 'input window, operand 0, single buffered']
    #allocation3 [shape = 's32[1]{0}', space=sflag, size = 0x4, scoped, tag = 'scoped memory for tpu_custom_call.1']
    #allocation4 [shape = 's32[1]{0}', space=sflag, size = 0x4, scoped, tag = 'scoped memory for tpu_custom_call.1']
    #allocation5 [shape = 'u8[65536]{0}', space=vmem, size = 0x10000, scoped, tag = 'input window, operand 1, single buffered']
    #allocation6 [shape = 's32[1]{0}', space=sflag, size = 0x4, scoped, tag = 'scoped memory for tpu_custom_call.1']
    #allocation7 [shape = 'u8[32768]{0}', space=vmem, size = 0x8000, scoped, tag = 'output window, operand 0, single buffered']
    #allocation8 [shape = 'u8[32768]{0}', space=vmem, size = 0x8000, scoped, tag = 'output window, operand 1, single buffered']
    #allocation9 [shape = 's32[1]{0}', space=sflag, size = 0x4, scoped, tag = 'scoped memory for tpu_custom_call.1']
    %9 = vsyncpa [#allocation3], 0
    %10 = vsyncpa [#allocation6], 0
    %11 = vsyncpa [#allocation4], 0
    %12 = vsyncpa [#allocation9], 0
    // Predicated region
    $region2: #{tpu_custom_call.1} parent=1 // pred_check
      _
    $region3: #{tpu_custom_call.1} parent=1 // pred_check_branch
      %14 = sbr.rel (0) target = $region5
    $region4: #{tpu_custom_call.1} parent=1 // pred_region
      %s16 = ssub.s32 2048, 2048
      %17 = vsyncadd [#allocation3], %s16
      %s18 = sshll.u32 [#allocation2], 4
      %s19 = int_to_ptr.vmem [resolvable:$true] %s18
      %24 = dma.hbm_to_vmem [thread:$0]  %s0, 2048, %s19, [#allocation3], 128, 128, 8
    $region5: #{tpu_custom_call.1} parent=1 // pred_fallthru
      _
    // Predicated region
    $region6: #{tpu_custom_call.1} parent=1 // pred_check
      _
    $region7: #{tpu_custom_call.1} parent=1 // pred_check_branch
      %26 = sbr.rel (0) target = $region9
    $region8: #{tpu_custom_call.1} parent=1 // pred_region
      %s28 = ssub.s32 2048, 2048
      %29 = vsyncadd [#allocation6], %s28
      %s30 = sshll.u32 [#allocation5], 4
      %s31 = int_to_ptr.vmem [resolvable:$true] %s30
      %36 = dma.hbm_to_vmem [thread:$0]  %s1, 2048, %s31, [#allocation6], 128, 128, 8
    $region9: #{tpu_custom_call.1} parent=1 // pred_fallthru
      _
    // Predicated region
    $region10: #{tpu_custom_call.1} parent=1 // pred_check
      _
    $region11: #{tpu_custom_call.1} parent=1 // pred_check_branch
      %38 = sbr.rel (0) target = $region13
    $region12: #{tpu_custom_call.1} parent=1 // pred_region
      %39 = dma.done [#allocation3], 2048
    $region13: #{tpu_custom_call.1} parent=1 // pred_fallthru
      _
    // Predicated region
    $region14: #{tpu_custom_call.1} parent=1 // pred_check
      _
    $region15: #{tpu_custom_call.1} parent=1 // pred_check_branch
      %41 = sbr.rel (0) target = $region17
    $region16: #{tpu_custom_call.1} parent=1 // pred_region
      %42 = dma.done [#allocation6], 2048
    $region17: #{tpu_custom_call.1} parent=1 // pred_fallthru
      _
    %v44 = vld [vmem:[#allocation2] sm:$0xff]
    %v45 = vld [vmem:[#allocation2 + $0x8] sm:$0xff]
    %v46 = vld [vmem:[#allocation2 + $0x10] sm:$0xff]
    %v47 = vld [vmem:[#allocation2 + $0x18] sm:$0xff]
    %v48 = vld [vmem:[#allocation2 + $0x20] sm:$0xff]
    %v49 = vld [vmem:[#allocation2 + $0x28] sm:$0xff]
    %v50 = vld [vmem:[#allocation2 + $0x30] sm:$0xff]
    %v51 = vld [vmem:[#allocation2 + $0x38] sm:$0xff]
    %v52 = vld [vmem:[#allocation2 + $0x40] sm:$0xff]
    %v53 = vld [vmem:[#allocation2 + $0x48] sm:$0xff]
    %v54 = vld [vmem:[#allocation2 + $0x50] sm:$0xff]
    %v55 = vld [vmem:[#allocation2 + $0x58] sm:$0xff]
    %v56 = vld [vmem:[#allocation2 + $0x60] sm:$0xff]
    %v57 = vld [vmem:[#allocation2 + $0x68] sm:$0xff]
    %v58 = vld [vmem:[#allocation2 + $0x70] sm:$0xff]
    %v59 = vld [vmem:[#allocation2 + $0x78] sm:$0xff]
    %v60 = vlaneseq
    %v61 = vand.u32 %v60, 127
    %vm62 = vcmp.lt.s32.totalorder %v61, 32
    %v63 = vsel %vm62, %v44, -inf
    %v64 = vsel %vm62, %v45, -inf
    %v65 = vsel %vm62, %v46, -inf
    %v66 = vsel %vm62, %v47, -inf
    %v67 = vsel %vm62, %v48, -inf
    %v68 = vsel %vm62, %v49, -inf
    %v69 = vsel %vm62, %v50, -inf
    %v70 = vsel %vm62, %v51, -inf
    %v71 = vsel %vm62, %v52, -inf
    %v72 = vsel %vm62, %v53, -inf
    %v73 = vsel %vm62, %v54, -inf
    %v74 = vsel %vm62, %v55, -inf
    %v75 = vsel %vm62, %v56, -inf
    %v76 = vsel %vm62, %v57, -inf
    %v77 = vsel %vm62, %v58, -inf
    %v78 = vsel %vm62, %v59, -inf
    %79 = vmax.xlane.f32.xlu0 %v63
    %v80 = vpop.xlane.xlu0 %79
    %81 = vmax.xlane.f32.xlu0 %v64
    %v82 = vpop.xlane.xlu0 %81
    %83 = vmax.xlane.f32.xlu0 %v65
    %v84 = vpop.xlane.xlu0 %83
    %85 = vmax.xlane.f32.xlu0 %v66
    %v86 = vpop.xlane.xlu0 %85
    %87 = vmax.xlane.f32.xlu0 %v67
    %v88 = vpop.xlane.xlu0 %87
    %89 = vmax.xlane.f32.xlu0 %v68
    %v90 = vpop.xlane.xlu0 %89
    %91 = vmax.xlane.f32.xlu0 %v69
    %v92 = vpop.xlane.xlu0 %91
    %93 = vmax.xlane.f32.xlu0 %v70
    %v94 = vpop.xlane.xlu0 %93
    %95 = vmax.xlane.f32.xlu0 %v71
    %v96 = vpop.xlane.xlu0 %95
    %97 = vmax.xlane.f32.xlu0 %v72
    %v98 = vpop.xlane.xlu0 %97
    %99 = vmax.xlane.f32.xlu0 %v73
    %v100 = vpop.xlane.xlu0 %99
    %101 = vmax.xlane.f32.xlu0 %v74
    %v102 = vpop.xlane.xlu0 %101
    %103 = vmax.xlane.f32.xlu0 %v75
    %v104 = vpop.xlane.xlu0 %103
    %105 = vmax.xlane.f32.xlu0 %v76
    %v106 = vpop.xlane.xlu0 %105
    %107 = vmax.xlane.f32.xlu0 %v77
    %v108 = vpop.xlane.xlu0 %107
    %109 = vmax.xlane.f32.xlu0 %v78
    %v110 = vpop.xlane.xlu0 %109
    %v111 = vsub.f32 %v63, %v80
    %v112 = vsub.f32 %v64, %v82
    %v113 = vsub.f32 %v65, %v84
    %v114 = vsub.f32 %v66, %v86
    %v115 = vsub.f32 %v67, %v88
    %v116 = vsub.f32 %v68, %v90
    %v117 = vsub.f32 %v69, %v92
    %v118 = vsub.f32 %v70, %v94
    %v119 = vsub.f32 %v71, %v96
    %v120 = vsub.f32 %v72, %v98
    %v121 = vsub.f32 %v73, %v100
    %v122 = vsub.f32 %v74, %v102
    %v123 = vsub.f32 %v75, %v104
    %v124 = vsub.f32 %v76, %v106
    %v125 = vsub.f32 %v77, %v108
    %v126 = vsub.f32 %v78, %v110
    %v127 = vmul.f32 %v111, 1.442695
    %v128 = vpow.pop %v127
    %v129 = vmul.f32 %v112, 1.442695
    %v130 = vpow.pop %v129
    %v131 = vmul.f32 %v113, 1.442695
    %v132 = vpow.pop %v131
    %v133 = vmul.f32 %v114, 1.442695
    %v134 = vpow.pop %v133
    %v135 = vmul.f32 %v115, 1.442695
    %v136 = vpow.pop %v135
    %v137 = vmul.f32 %v116, 1.442695
    %v138 = vpow.pop %v137
    %v139 = vmul.f32 %v117, 1.442695
    %v140 = vpow.pop %v139
    %v141 = vmul.f32 %v118, 1.442695
    %v142 = vpow.pop %v141
    %v143 = vmul.f32 %v119, 1.442695
    %v144 = vpow.pop %v143
    %v145 = vmul.f32 %v120, 1.442695
    %v146 = vpow.pop %v145
    %v147 = vmul.f32 %v121, 1.442695
    %v148 = vpow.pop %v147
    %v149 = vmul.f32 %v122, 1.442695
    %v150 = vpow.pop %v149
    %v151 = vmul.f32 %v123, 1.442695
    %v152 = vpow.pop %v151
    %v153 = vmul.f32 %v124, 1.442695
    %v154 = vpow.pop %v153
    %v155 = vmul.f32 %v125, 1.442695
    %v156 = vpow.pop %v155
    %v157 = vmul.f32 %v126, 1.442695
    %v158 = vpow.pop %v157
    %159 = vadd.xlane.f32.xlu0 %v128
    %v160 = vpop.xlane.xlu0 %159
    %161 = vadd.xlane.f32.xlu0 %v130
    %v162 = vpop.xlane.xlu0 %161
    %163 = vadd.xlane.f32.xlu0 %v132
    %v164 = vpop.xlane.xlu0 %163
    %165 = vadd.xlane.f32.xlu0 %v134
    %v166 = vpop.xlane.xlu0 %165
    %167 = vadd.xlane.f32.xlu0 %v136
    %v168 = vpop.xlane.xlu0 %167
    %169 = vadd.xlane.f32.xlu0 %v138
    %v170 = vpop.xlane.xlu0 %169
    %171 = vadd.xlane.f32.xlu0 %v140
    %v172 = vpop.xlane.xlu0 %171
    %173 = vadd.xlane.f32.xlu0 %v142
    %v174 = vpop.xlane.xlu0 %173
    %175 = vadd.xlane.f32.xlu0 %v144
    %v176 = vpop.xlane.xlu0 %175
    %177 = vadd.xlane.f32.xlu0 %v146
    %v178 = vpop.xlane.xlu0 %177
    %179 = vadd.xlane.f32.xlu0 %v148
    %v180 = vpop.xlane.xlu0 %179
    %181 = vadd.xlane.f32.xlu0 %v150
    %v182 = vpop.xlane.xlu0 %181
    %183 = vadd.xlane.f32.xlu0 %v152
    %v184 = vpop.xlane.xlu0 %183
    %185 = vadd.xlane.f32.xlu0 %v154
    %v186 = vpop.xlane.xlu0 %185
    %187 = vadd.xlane.f32.xlu0 %v156
    %v188 = vpop.xlane.xlu0 %187
    %189 = vadd.xlane.f32.xlu0 %v158
    %v190 = vpop.xlane.xlu0 %189
    %v191 = vrcp.pop %v160
    %v192 = vrcp.pop %v162
    %v193 = vrcp.pop %v164
    %v194 = vrcp.pop %v166
    %v195 = vrcp.pop %v168
    %v196 = vrcp.pop %v170
    %v197 = vrcp.pop %v172
    %v198 = vrcp.pop %v174
    %v199 = vrcp.pop %v176
    %v200 = vrcp.pop %v178
    %v201 = vrcp.pop %v180
    %v202 = vrcp.pop %v182
    %v203 = vrcp.pop %v184
    %v204 = vrcp.pop %v186
    %v205 = vrcp.pop %v188
    %v206 = vrcp.pop %v190
    %v207 = vmul.f32 %v128, %v191
    %v208 = vmul.f32 %v130, %v192
    %v209 = vmul.f32 %v132, %v193
    %v210 = vmul.f32 %v134, %v194
    %v211 = vmul.f32 %v136, %v195
    %v212 = vmul.f32 %v138, %v196
    %v213 = vmul.f32 %v140, %v197
    %v214 = vmul.f32 %v142, %v198
    %v215 = vmul.f32 %v144, %v199
    %v216 = vmul.f32 %v146, %v200
    %v217 = vmul.f32 %v148, %v201
    %v218 = vmul.f32 %v150, %v202
    %v219 = vmul.f32 %v152, %v203
    %v220 = vmul.f32 %v154, %v204
    %v221 = vmul.f32 %v156, %v205
    %v222 = vmul.f32 %v158, %v206
    %v223 = vlaneseq
    %v224 = vshrl.u32 %v223, 7
    %v225 = vadd.s32 %v224, 8
    %v226 = vadd.s32 %v224, 16
    %v227 = vadd.s32 %v224, 24
    %v228 = vadd.s32 %v224, 32
    %v229 = vadd.s32 %v224, 40
    %v230 = vadd.s32 %v224, 48
    %v231 = vadd.s32 %v224, 56
    %v232 = vadd.s32 %v224, 64
    %v233 = vadd.s32 %v224, 72
    %v234 = vadd.s32 %v224, 80
    %v235 = vadd.s32 %v224, 88
    %v236 = vadd.s32 %v224, 96
    %v237 = vadd.s32 %v224, 104
    %v238 = vadd.s32 %v224, 112
    %v239 = vadd.s32 %v224, 120
    %s240 = smul.u32 0, 128
    %v241 = vstv %s240
    %v242 = vadd.s32 %v224, %v241
    %v243 = vadd.s32 %v225, %v241
    %v244 = vadd.s32 %v226, %v241
    %v245 = vadd.s32 %v227, %v241
    %v246 = vadd.s32 %v228, %v241
    %v247 = vadd.s32 %v229, %v241
    %v248 = vadd.s32 %v230, %v241
    %v249 = vadd.s32 %v231, %v241
    %v250 = vadd.s32 %v232, %v241
    %v251 = vadd.s32 %v233, %v241
    %v252 = vadd.s32 %v234, %v241
    %v253 = vadd.s32 %v235, %v241
    %v254 = vadd.s32 %v236, %v241
    %v255 = vadd.s32 %v237, %v241
    %v256 = vadd.s32 %v238, %v241
    %v257 = vadd.s32 %v239, %v241
    %vm258 = vcmp.lt.s32.totalorder %v242, 16
    %vm259 = vcmp.lt.s32.totalorder %v243, 16
    %vm260 = vcmp.lt.s32.totalorder %v244, 16
    %vm261 = vcmp.lt.s32.totalorder %v245, 16
    %vm262 = vcmp.lt.s32.totalorder %v246, 16
    %vm263 = vcmp.lt.s32.totalorder %v247, 16
    %vm264 = vcmp.lt.s32.totalorder %v248, 16
    %vm265 = vcmp.lt.s32.totalorder %v249, 16
    %vm266 = vcmp.lt.s32.totalorder %v250, 16
    %vm267 = vcmp.lt.s32.totalorder %v251, 16
    %vm268 = vcmp.lt.s32.totalorder %v252, 16
    %vm269 = vcmp.lt.s32.totalorder %v253, 16
    %vm270 = vcmp.lt.s32.totalorder %v254, 16
    %vm271 = vcmp.lt.s32.totalorder %v255, 16
    %vm272 = vcmp.lt.s32.totalorder %v256, 16
    %vm273 = vcmp.lt.s32.totalorder %v257, 16
    %v274 = vsel %vm258, %v207, 0.0
    %v275 = vsel %vm259, %v208, 0.0
    %v276 = vsel %vm260, %v209, 0.0
    %v277 = vsel %vm261, %v210, 0.0
    %v278 = vsel %vm262, %v211, 0.0
    %v279 = vsel %vm263, %v212, 0.0
    %v280 = vsel %vm264, %v213, 0.0
    %v281 = vsel %vm265, %v214, 0.0
    %v282 = vsel %vm266, %v215, 0.0
    %v283 = vsel %vm267, %v216, 0.0
    %v284 = vsel %vm268, %v217, 0.0
    %v285 = vsel %vm269, %v218, 0.0
    %v286 = vsel %vm270, %v219, 0.0
    %v287 = vsel %vm271, %v220, 0.0
    %v288 = vsel %vm272, %v221, 0.0
    %v289 = vsel %vm273, %v222, 0.0
    %v290 = vpack.c.bf16 %v275, %v274
    %v291 = vpack.c.bf16 %v277, %v276
    %v292 = vpack.c.bf16 %v279, %v278
    %v293 = vpack.c.bf16 %v281, %v280
    %v294 = vpack.c.bf16 %v283, %v282
    %v295 = vpack.c.bf16 %v285, %v284
    %v296 = vpack.c.bf16 %v287, %v286
    %v297 = vpack.c.bf16 %v289, %v288
    %v298 = vld [vmem:[#allocation5] sm:$0xff]
    %v299 = vld [vmem:[#allocation5 + $0x8] sm:$0xff]
    %v300 = vld [vmem:[#allocation5 + $0x10] sm:$0xff]
    %v301 = vld [vmem:[#allocation5 + $0x18] sm:$0xff]
    %v302 = vld [vmem:[#allocation5 + $0x20] sm:$0xff]
    %v303 = vld [vmem:[#allocation5 + $0x28] sm:$0xff]
    %v304 = vld [vmem:[#allocation5 + $0x30] sm:$0xff]
    %v305 = vld [vmem:[#allocation5 + $0x38] sm:$0xff]
    %v306 = vld [vmem:[#allocation5 + $0x40] sm:$0xff]
    %v307 = vld [vmem:[#allocation5 + $0x48] sm:$0xff]
    %v308 = vld [vmem:[#allocation5 + $0x50] sm:$0xff]
    %v309 = vld [vmem:[#allocation5 + $0x58] sm:$0xff]
    %v310 = vld [vmem:[#allocation5 + $0x60] sm:$0xff]
    %v311 = vld [vmem:[#allocation5 + $0x68] sm:$0xff]
    %v312 = vld [vmem:[#allocation5 + $0x70] sm:$0xff]
    %v313 = vld [vmem:[#allocation5 + $0x78] sm:$0xff]
    %v314 = vpack.c.bf16 %v299, %v298
    %v315 = vpack.c.bf16 %v301, %v300
    %v316 = vpack.c.bf16 %v303, %v302
    %v317 = vpack.c.bf16 %v305, %v304
    %v318 = vpack.c.bf16 %v307, %v306
    %v319 = vpack.c.bf16 %v309, %v308
    %v320 = vpack.c.bf16 %v311, %v310
    %v321 = vpack.c.bf16 %v313, %v312
    %322 = vmatprep.subr.bf16.mxu0 0
    %323 = vmatpush1.bf16.msra.mxu0 %v321
    %324 = vmatprep.subr.bf16.mxu0 0
    %325 = vmatpush1.bf16.msra.mxu0 %v320
    %326 = vmatprep.subr.bf16.mxu0 0
    %327 = vmatpush1.bf16.msra.mxu0 %v319
    %328 = vmatprep.subr.bf16.mxu0 0
    %329 = vmatpush1.bf16.msra.mxu0 %v318
    %330 = vmatprep.subr.bf16.mxu0 0
    %331 = vmatpush1.bf16.msra.mxu0 %v317
    %332 = vmatprep.subr.bf16.mxu0 0
    %333 = vmatpush1.bf16.msra.mxu0 %v316
    %334 = vmatprep.subr.bf16.mxu0 0
    %335 = vmatpush1.bf16.msra.mxu0 %v315
    %336 = vmatprep.subr.bf16.mxu0 0
    %337 = vmatpush1.bf16.msra.mxu0 %v314
    %338 = vmatprep.subr.bf16.mxu0 0
    %339 = vmatpush2.bf16.msra.mxu0 0
    %340 = vmatprep.subr.bf16.mxu0 0
    %341 = vmatpush2.bf16.msra.mxu0 0
    %342 = vmatprep.subr.bf16.mxu0 0
    %343 = vmatpush2.bf16.msra.mxu0 0
    %344 = vmatprep.subr.bf16.mxu0 0
    %345 = vmatpush2.bf16.msra.mxu0 0
    %346 = vmatprep.subr.bf16.mxu0 0
    %347 = vmatpush2.bf16.msra.mxu0 0
    %348 = vmatprep.subr.bf16.mxu0 0
    %349 = vmatpush2.bf16.msra.mxu0 0
    %350 = vmatprep.subr.bf16.mxu0 0
    %351 = vmatpush2.bf16.msra.mxu0 0
    %352 = vmatprep.subr.bf16.mxu0 0
    %353 = vmatpush2.bf16.msra.mxu0 0
    %354 = vmatprep.mubr.bf16.mxu0 0
    %355 = vmatmul.mubr.bf16.gmra.mxu0 %v290
    %v356 = vpop.f32.mrf.mxu0
    %v357 = vadd.f32 0.0, %v356
    %v358 = vpop.f32.mrf.mxu0
    %v359 = vpop.f32.mrf.mxu0
    %v360 = vadd.f32 0.0, %v359
    %v361 = vpop.f32.mrf.mxu0
    %362 = vmatprep.mubr.bf16.mxu0 0
    %363 = vmatmul.mubr.bf16.gmra.mxu0 %v291
    %v364 = vpop.f32.mrf.mxu0
    %v365 = vadd.f32 0.0, %v364
    %v366 = vpop.f32.mrf.mxu0
    %v367 = vpop.f32.mrf.mxu0
    %v368 = vadd.f32 0.0, %v367
    %v369 = vpop.f32.mrf.mxu0
    %370 = vmatprep.mubr.bf16.mxu0 0
    %371 = vmatmul.mubr.bf16.gmra.mxu0 %v292
    %v372 = vpop.f32.mrf.mxu0
    %v373 = vadd.f32 0.0, %v372
    %v374 = vpop.f32.mrf.mxu0
    %v375 = vpop.f32.mrf.mxu0
    %v376 = vadd.f32 0.0, %v375
    %v377 = vpop.f32.mrf.mxu0
    %378 = vmatprep.mubr.bf16.mxu0 0
    %379 = vmatmul.mubr.bf16.gmra.mxu0 %v293
    %v380 = vpop.f32.mrf.mxu0
    %v381 = vadd.f32 0.0, %v380
    %v382 = vpop.f32.mrf.mxu0
    %v383 = vpop.f32.mrf.mxu0
    %v384 = vadd.f32 0.0, %v383
    %v385 = vpop.f32.mrf.mxu0
    %386 = vmatprep.mubr.bf16.mxu0 0
    %387 = vmatmul.mubr.bf16.gmra.mxu0 %v294
    %v388 = vpop.f32.mrf.mxu0
    %v389 = vadd.f32 0.0, %v388
    %v390 = vpop.f32.mrf.mxu0
    %v391 = vpop.f32.mrf.mxu0
    %v392 = vadd.f32 0.0, %v391
    %v393 = vpop.f32.mrf.mxu0
    %394 = vmatprep.mubr.bf16.mxu0 0
    %395 = vmatmul.mubr.bf16.gmra.mxu0 %v295
    %v396 = vpop.f32.mrf.mxu0
    %v397 = vadd.f32 0.0, %v396
    %v398 = vpop.f32.mrf.mxu0
    %v399 = vpop.f32.mrf.mxu0
    %v400 = vadd.f32 0.0, %v399
    %v401 = vpop.f32.mrf.mxu0
    %402 = vmatprep.mubr.bf16.mxu0 0
    %403 = vmatmul.mubr.bf16.gmra.mxu0 %v296
    %v404 = vpop.f32.mrf.mxu0
    %v405 = vadd.f32 0.0, %v404
    %v406 = vpop.f32.mrf.mxu0
    %v407 = vpop.f32.mrf.mxu0
    %v408 = vadd.f32 0.0, %v407
    %v409 = vpop.f32.mrf.mxu0
    %410 = vmatprep.mubr.bf16.mxu0 0
    %411 = vmatmul.mubr.bf16.gmra.mxu0 %v297
    %v412 = vpop.f32.mrf.mxu0
    %v413 = vadd.f32 0.0, %v412
    %v414 = vpop.f32.mrf.mxu0
    %v415 = vpop.f32.mrf.mxu0
    %v416 = vadd.f32 0.0, %v415
    %v417 = vpop.f32.mrf.mxu0
    %418 = vdwg.mxu0
    %v419 = vpack.c.bf16 %v360, %v357
    %v420 = vpack.c.bf16 %v368, %v365
    %v421 = vpack.c.bf16 %v376, %v373
    %v422 = vpack.c.bf16 %v384, %v381
    %v423 = vpack.c.bf16 %v392, %v389
    %v424 = vpack.c.bf16 %v400, %v397
    %v425 = vpack.c.bf16 %v408, %v405
    %v426 = vpack.c.bf16 %v416, %v413
    %v435 = vunpack.c.l.b16 %v419
    %v436 = vunpack.c.h.b16 %v419
    %v437 = vunpack.c.l.b16 %v420
    %v438 = vunpack.c.h.b16 %v420
    %v439 = vunpack.c.l.b16 %v421
    %v440 = vunpack.c.h.b16 %v421
    %v441 = vunpack.c.l.b16 %v422
    %v442 = vunpack.c.h.b16 %v422
    %v443 = vunpack.c.l.b16 %v423
    %v444 = vunpack.c.h.b16 %v423
    %v445 = vunpack.c.l.b16 %v424
    %v446 = vunpack.c.h.b16 %v424
    %v447 = vunpack.c.l.b16 %v425
    %v448 = vunpack.c.h.b16 %v425
    %v449 = vunpack.c.l.b16 %v426
    %v450 = vunpack.c.h.b16 %v426
    %v451 = vpack.c.b16 %v435, %v435
    %v452 = vpack.c.b16 %v436, %v436
    %v453 = vpack.c.b16 %v437, %v437
    %v454 = vpack.c.b16 %v438, %v438
    %v455 = vpack.c.b16 %v439, %v439
    %v456 = vpack.c.b16 %v440, %v440
    %v457 = vpack.c.b16 %v441, %v441
    %v458 = vpack.c.b16 %v442, %v442
    %v459 = vpack.c.b16 %v443, %v443
    %v460 = vpack.c.b16 %v444, %v444
    %v461 = vpack.c.b16 %v445, %v445
    %v462 = vpack.c.b16 %v446, %v446
    %v463 = vpack.c.b16 %v447, %v447
    %v464 = vpack.c.b16 %v448, %v448
    %v465 = vpack.c.b16 %v449, %v449
    %v466 = vpack.c.b16 %v450, %v450
    %483 = vst [vmem:[#allocation7] sm:$0xf] %v451
    %484 = vst [vmem:[#allocation7 + $0x4] sm:$0xf] %v452
    %485 = vst [vmem:[#allocation7 + $0x8] sm:$0xf] %v453
    %486 = vst [vmem:[#allocation7 + $0xc] sm:$0xf] %v454
    %487 = vst [vmem:[#allocation7 + $0x10] sm:$0xf] %v455
    %488 = vst [vmem:[#allocation7 + $0x14] sm:$0xf] %v456
    %489 = vst [vmem:[#allocation7 + $0x18] sm:$0xf] %v457
    %490 = vst [vmem:[#allocation7 + $0x1c] sm:$0xf] %v458
    %491 = vst [vmem:[#allocation7 + $0x20] sm:$0xf] %v459
    %492 = vst [vmem:[#allocation7 + $0x24] sm:$0xf] %v460
    %493 = vst [vmem:[#allocation7 + $0x28] sm:$0xf] %v461
    %494 = vst [vmem:[#allocation7 + $0x2c] sm:$0xf] %v462
    %495 = vst [vmem:[#allocation7 + $0x30] sm:$0xf] %v463
    %496 = vst [vmem:[#allocation7 + $0x34] sm:$0xf] %v464
    %497 = vst [vmem:[#allocation7 + $0x38] sm:$0xf] %v465
    %498 = vst [vmem:[#allocation7 + $0x3c] sm:$0xf] %v466
    %499 = vxpose.xlu0.b32.start [1/16] %v357, 128
    %500 = vxpose.xlu0.b32.cont [2/16] %v360, 128
    %501 = vxpose.xlu0.b32.cont [3/16] %v365, 128
    %502 = vxpose.xlu0.b32.cont [4/16] %v368, 128
    %503 = vxpose.xlu0.b32.cont [5/16] %v373, 128
    %504 = vxpose.xlu0.b32.cont [6/16] %v376, 128
    %505 = vxpose.xlu0.b32.cont [7/16] %v381, 128
    %506 = vxpose.xlu0.b32.cont [8/16] %v384, 128
    %507 = vxpose.xlu0.b32.cont [9/16] %v389, 128
    %508 = vxpose.xlu0.b32.cont [10/16] %v392, 128
    %509 = vxpose.xlu0.b32.cont [11/16] %v397, 128
    %510 = vxpose.xlu0.b32.cont [12/16] %v400, 128
    %511 = vxpose.xlu0.b32.cont [13/16] %v405, 128
    %512 = vxpose.xlu0.b32.cont [14/16] %v408, 128
    %513 = vxpose.xlu0.b32.cont [15/16] %v413, 128
    %514 = vxpose.xlu0.b32.end [16/16] %v416, 128
    %v515 = vpop.trf.xlu0
    %v516 = vpop.trf.xlu0
    %v517 = vpop.trf.xlu0
    %v518 = vpop.trf.xlu0
    %v519 = vpop.trf.xlu0
    %v520 = vpop.trf.xlu0
    %v521 = vpop.trf.xlu0
    %v522 = vpop.trf.xlu0
    %v523 = vpop.trf.xlu0
    %v524 = vpop.trf.xlu0
    %v525 = vpop.trf.xlu0
    %v526 = vpop.trf.xlu0
    %v527 = vpop.trf.xlu0
    %v528 = vpop.trf.xlu0
    %v529 = vpop.trf.xlu0
    %v530 = vpop.trf.xlu0
    %v531 = vpack.c.bf16 %v516, %v515
    %v532 = vpack.c.bf16 %v518, %v517
    %v533 = vpack.c.bf16 %v520, %v519
    %v534 = vpack.c.bf16 %v522, %v521
    %v535 = vpack.c.bf16 %v524, %v523
    %v536 = vpack.c.bf16 %v526, %v525
    %v537 = vpack.c.bf16 %v528, %v527
    %v538 = vpack.c.bf16 %v530, %v529
    %v547 = vunpack.c.l.b16 %v531
    %v548 = vunpack.c.h.b16 %v531
    %v549 = vunpack.c.l.b16 %v532
    %v550 = vunpack.c.h.b16 %v532
    %v551 = vunpack.c.l.b16 %v533
    %v552 = vunpack.c.h.b16 %v533
    %v553 = vunpack.c.l.b16 %v534
    %v554 = vunpack.c.h.b16 %v534
    %v555 = vunpack.c.l.b16 %v535
    %v556 = vunpack.c.h.b16 %v535
    %v557 = vunpack.c.l.b16 %v536
    %v558 = vunpack.c.h.b16 %v536
    %v559 = vunpack.c.l.b16 %v537
    %v560 = vunpack.c.h.b16 %v537
    %v561 = vunpack.c.l.b16 %v538
    %v562 = vunpack.c.h.b16 %v538
    %v563 = vpack.c.b16 %v547, %v547
    %v564 = vpack.c.b16 %v548, %v548
    %v565 = vpack.c.b16 %v549, %v549
    %v566 = vpack.c.b16 %v550, %v550
    %v567 = vpack.c.b16 %v551, %v551
    %v568 = vpack.c.b16 %v552, %v552
    %v569 = vpack.c.b16 %v553, %v553
    %v570 = vpack.c.b16 %v554, %v554
    %v571 = vpack.c.b16 %v555, %v555
    %v572 = vpack.c.b16 %v556, %v556
    %v573 = vpack.c.b16 %v557, %v557
    %v574 = vpack.c.b16 %v558, %v558
    %v575 = vpack.c.b16 %v559, %v559
    %v576 = vpack.c.b16 %v560, %v560
    %v577 = vpack.c.b16 %v561, %v561
    %v578 = vpack.c.b16 %v562, %v562
    %595 = vst [vmem:[#allocation8] sm:$0xf] %v563
    %596 = vst [vmem:[#allocation8 + $0x4] sm:$0xf] %v564
    %597 = vst [vmem:[#allocation8 + $0x8] sm:$0xf] %v565
    %598 = vst [vmem:[#allocation8 + $0xc] sm:$0xf] %v566
    %599 = vst [vmem:[#allocation8 + $0x10] sm:$0xf] %v567
    %600 = vst [vmem:[#allocation8 + $0x14] sm:$0xf] %v568
    %601 = vst [vmem:[#allocation8 + $0x18] sm:$0xf] %v569
    %602 = vst [vmem:[#allocation8 + $0x1c] sm:$0xf] %v570
    %603 = vst [vmem:[#allocation8 + $0x20] sm:$0xf] %v571
    %604 = vst [vmem:[#allocation8 + $0x24] sm:$0xf] %v572
    %605 = vst [vmem:[#allocation8 + $0x28] sm:$0xf] %v573
    %606 = vst [vmem:[#allocation8 + $0x2c] sm:$0xf] %v574
    %607 = vst [vmem:[#allocation8 + $0x30] sm:$0xf] %v575
    %608 = vst [vmem:[#allocation8 + $0x34] sm:$0xf] %v576
    %609 = vst [vmem:[#allocation8 + $0x38] sm:$0xf] %v577
    %610 = vst [vmem:[#allocation8 + $0x3c] sm:$0xf] %v578
    // Predicated region
    $region18: #{tpu_custom_call.1} parent=1 // pred_check
      _
    $region19: #{tpu_custom_call.1} parent=1 // pred_check_branch
      %612 = sbr.rel (0) target = $region21
    $region20: #{tpu_custom_call.1} parent=1 // pred_region
      %s614 = ssub.s32 1024, 1024
      %615 = vsyncadd [#allocation4], %s614
      %s616 = sshll.u32 [#allocation7], 4
      %s617 = int_to_ptr.vmem [resolvable:$true] %s616
      %622 = dma.vmem_to_hbm [thread:$0]  %s617, 1024, %s2, [#allocation4], 64, 64, 4
    $region21: #{tpu_custom_call.1} parent=1 // pred_fallthru
      _
    // Predicated region
    $region22: #{tpu_custom_call.1} parent=1 // pred_check
      _
    $region23: #{tpu_custom_call.1} parent=1 // pred_check_branch
      %624 = sbr.rel (0) target = $region25
    $region24: #{tpu_custom_call.1} parent=1 // pred_region
      %s626 = ssub.s32 1024, 1024
      %627 = vsyncadd [#allocation9], %s626
      %s628 = sshll.u32 [#allocation8], 4
      %s629 = int_to_ptr.vmem [resolvable:$true] %s628
      %634 = dma.vmem_to_hbm [thread:$0]  %s629, 1024, %s3, [#allocation9], 64, 64, 4
    $region25: #{tpu_custom_call.1} parent=1 // pred_fallthru
      _
    // Predicated region
    $region26: #{tpu_custom_call.1} parent=1 // pred_check
      _
    $region27: #{tpu_custom_call.1} parent=1 // pred_check_branch
      %636 = sbr.rel (0) target = $region29
    $region28: #{tpu_custom_call.1} parent=1 // pred_region
      %637 = dma.done [#allocation4], 1024
    $region29: #{tpu_custom_call.1} parent=1 // pred_fallthru
      _
    // Predicated region
    $region30: #{tpu_custom_call.1} parent=1 // pred_check
      _
    $region31: #{tpu_custom_call.1} parent=1 // pred_check_branch
      %639 = sbr.rel (0) target = $region33
    $region32: #{tpu_custom_call.1} parent=1 // pred_region
      %640 = dma.done [#allocation9], 1024
    $region33: #{tpu_custom_call.1} parent=1 // pred_fallthru
      _
    %641 = vsyncpa [#allocation3], 1
    %642 = vsyncpa [#allocation6], 1
    %643 = vsyncpa [#allocation4], 1
    %644 = vsyncpa [#allocation9], 1

</llo_original>
